<compile_context>
chip_gen: v7x
topology: tpu7x:2x2x1
jax: 0.10.0
libtpu: 0.0.40
codegen_flags: <defaults>
</compile_context>

<pallas_src>
import jax
import jax.numpy as jnp
from jax.experimental import pallas as pl
from jax.experimental.pallas import tpu as pltpu


def slot_decoder_kernel(x_ref, wa_blk_ref, e_ref, w_rep_ref, b_ref, out_ref):
    # x_ref     : [TB, S*D]  lane-dense slot features (bf16)
    # wa_blk_ref: [S*D, S]   block-diagonal alpha-logit weight
    # e_ref     : [S, S*D]   0/1 slot->feature expansion matrix
    # w_rep_ref : [S*D, O]   decode weight, tiled S times along the contraction dim
    # b_ref     : [1, O]     decode bias (f32)
    # out_ref   : [TB, O]    decoded rows
    x = x_ref[...]                                                  # [TB, K] bf16

    # per-slot alpha logits on the MXU: [TB,K] @ [K,S] -> [TB,S], f32 accumulate.
    # (alpha-logit bias dropped: a slot-independent scalar shift is a softmax no-op)
    logits = jnp.dot(x, wa_blk_ref[...], preferred_element_type=jnp.float32)

    # softmax over slots in a 2-D [TB, S] layout (no trailing size-1 dims)
    m = jnp.max(logits, axis=-1, keepdims=True)                     # [TB, 1]
    ex = jnp.exp(logits - m)                                        # [TB, S]  (EUP)
    denom = jnp.sum(ex, axis=-1, keepdims=True)                     # [TB, 1]
    inv = pl.reciprocal(denom, approx=True)                         # EUP slot
    inv = inv * (2.0 - denom * inv)                                 # one Newton step
    alpha = ex * inv                                                # [TB, S] f32

    # broadcast alpha to lane-dense [TB, K] via the MXU (E is a 0/1 selector)
    alpha_exp = jnp.dot(alpha.astype(x.dtype), e_ref[...],
                        preferred_element_type=jnp.float32)         # [TB, K]

    # alpha-weighted slot features: full-128-lane VPU multiply, back to bf16 for MXU
    weighted = alpha_exp.astype(x.dtype) * x                        # [TB, K]

    # single decode matmul == sum_s alpha_s * (x_s @ W); bias added once (sum alpha == 1)
    out = jnp.dot(weighted, w_rep_ref[...], preferred_element_type=jnp.float32)
    out_ref[...] = (out + b_ref[...]).astype(out_ref.dtype)


def slot_decoder(x, w, b, w_alpha, *, tb=512):
    """x: [B, S, D], w: [D, O], b: [1, O] (or [O]), w_alpha: [1, D] (or [D]) -> [B, O]."""
    B, S, D = x.shape
    O = w.shape[-1]
    K = S * D

    x_flat = x.reshape(B, K)                   # free in HBM; lane-dense last dim
    cdt = x_flat.dtype                         # I/O + MXU dtype (bf16 in the demo)

    # tiny constants built once in the wrapper (outside the kernel)
    eye_s = jnp.eye(S, dtype=jnp.float32)
    wa_vec = w_alpha.reshape(-1).astype(jnp.float32)                          # [D]
    wa_blk = (eye_s[:, None, :] * wa_vec[None, :, None]).reshape(K, S).astype(cdt)  # [K,S]
    e_expand = jnp.repeat(eye_s, D, axis=1).astype(cdt)                       # [S,K]
    w_rep = jnp.tile(w.astype(cdt), (S, 1))                                   # [K,O]
    b_row = b.reshape(1, O).astype(jnp.float32)                               # [1,O]

    # --- batch tile size: the main tuning knob (sweep 512..2048 for large B) ---
    tb = max(8, min(tb, B))
    if B >= 16 and pl.cdiv(B, tb) < 2:
        tb = B // 2                            # keep >= 2 grid steps: both v7x TCs busy
    if tb != B:
        tb = max(8, (tb // 8) * 8)             # satisfy (8,128) sublane tiling
    grid = (pl.cdiv(B, tb),)
    # NOTE: if B % tb != 0, padded rows of the last tile hold unspecified data; their
    # outputs are discarded, but prefer tb | B (the demo uses divisible shapes).

    # explicit scoped-VMEM budget (double-buffered tiles + resident weights, with headroom)
    est = (2 * tb * K * cdt.itemsize
           + 2 * tb * O * cdt.itemsize
           + 2 * (K * S + S * K + K * O) * cdt.itemsize + O * 4)
    vmem_limit = int(min(64 * 2 ** 20, max(32 * 2 ** 20, 4 * est)))

    return pl.pallas_call(
        slot_decoder_kernel,
        out_shape=jax.ShapeDtypeStruct((B, O), cdt),
        grid_spec=pltpu.PrefetchScalarGridSpec(
            num_scalar_prefetch=0,
            grid=grid,
            in_specs=[
                pl.BlockSpec((tb, K), lambda i: (i, 0)),     # x, batch-tiled, lane-dense
                pl.BlockSpec((K, S), lambda i: (0, 0)),      # Wa_blk (resident)
                pl.BlockSpec((S, K), lambda i: (0, 0)),      # E      (resident)
                pl.BlockSpec((K, O), lambda i: (0, 0)),      # W_rep  (resident)
                pl.BlockSpec((1, O), lambda i: (0, 0)),      # bias
            ],
            out_specs=pl.BlockSpec((tb, O), lambda i: (i, 0)),   # lane-dense 2-D out
        ),
        compiler_params=pltpu.CompilerParams(
            dimension_semantics=("parallel",),
            vmem_limit_bytes=vmem_limit,
        ),
    )(x_flat, wa_blk, e_expand, w_rep, b_row)


def slot_decoder_ref(x, w, b, w_alpha):
    # un-reordered pure-JAX reference: decode every slot, then softmax-mix (all f32)
    xf = x.astype(jnp.float32)
    wf = w.astype(jnp.float32)
    feats = jnp.einsum("bsd,do->bso", xf, wf) + b.reshape(1, 1, -1).astype(jnp.float32)
    logits = jnp.einsum("bsd,d->bs", xf, w_alpha.reshape(-1).astype(jnp.float32))
    alpha = jax.nn.softmax(logits, axis=1)[..., None]
    return jnp.sum(alpha * feats, axis=1)


if __name__ == "__main__":
    # small shapes consistent with SlotDecoder(num_slots, slot_size, out_dim);
    # B sized so the batch-tiled grid has 2 steps (v7x: one per TensorCore).
    B, num_slots, slot_size, out_dim = 256, 8, 32, 128

    key = jax.random.PRNGKey(0)
    kx, kw, kb, kwa = jax.random.split(key, 4)

    # bf16 I/O (kernel path); the reference consumes the same bf16 values upcast to f32
    x = jax.random.normal(kx, (B, num_slots, slot_size), dtype=jnp.float32).astype(jnp.bfloat16)
    w = (jax.random.normal(kw, (slot_size, out_dim), dtype=jnp.float32) * 0.05).astype(jnp.bfloat16)
    b = jax.random.normal(kb, (1, out_dim), dtype=jnp.float32) * 0.01
    w_alpha = (jax.random.normal(kwa, (1, slot_size), dtype=jnp.float32) * 0.05).astype(jnp.bfloat16)

    out = slot_decoder(x, w, b, w_alpha, tb=512)
    jax.block_until_ready(out)

    ref = slot_decoder_ref(x, w, b, w_alpha)
    assert out.shape == (B, out_dim)
    # tolerance covers bf16 I/O, bf16 alpha weighting, and bf16 output rounding
    assert jnp.allclose(out.astype(jnp.float32), ref, atol=2e-2, rtol=2e-2), (
        float(jnp.max(jnp.abs(out.astype(jnp.float32) - ref))))

    print("KERNEL_OK")
</pallas_src>

<mosaic_0001>
module attributes {stable_mosaic.version = 11 : i64} {
  func.func @slot_decoder_kernel(%arg0: i32, %arg1: memref<128x256xbf16, #tpu.memory_space<vmem>>, %arg2: memref<256x8xbf16, #tpu.memory_space<vmem>>, %arg3: memref<8x256xbf16, #tpu.memory_space<vmem>>, %arg4: memref<256x128xbf16, #tpu.memory_space<vmem>>, %arg5: memref<1x128xf32, #tpu.memory_space<vmem>>, %arg6: memref<128x128xbf16, #tpu.memory_space<vmem>>) attributes {dimension_semantics = [#tpu.dimension_semantics<parallel>], iteration_bounds = array<i64: 2>, scalar_prefetch = 0 : i64, scratch_operands = 0 : i64, tpu.core_type = #tpu.core_type<tc>, window_params = [{transform_indices = @transform_0, window_bounds = array<i64: 128, 256>}, {pipeline_mode = #tpu.pipeline_mode<synchronous>, transform_indices = @transform_1, window_bounds = array<i64: 256, 8>}, {pipeline_mode = #tpu.pipeline_mode<synchronous>, transform_indices = @transform_2, window_bounds = array<i64: 8, 256>}, {pipeline_mode = #tpu.pipeline_mode<synchronous>, transform_indices = @transform_3, window_bounds = array<i64: 256, 128>}, {pipeline_mode = #tpu.pipeline_mode<synchronous>, transform_indices = @transform_4, window_bounds = array<i64: 1, 128>}, {transform_indices = @transform_5, window_bounds = array<i64: 128, 128>}]} {
    %c0 = arith.constant 0 : index
    %c0_0 = arith.constant 0 : index
    %0 = vector.load %arg1[%c0, %c0_0] : memref<128x256xbf16, #tpu.memory_space<vmem>>, vector<128x256xbf16>
    %c0_1 = arith.constant 0 : index
    %c0_2 = arith.constant 0 : index
    %1 = vector.load %arg2[%c0_1, %c0_2] : memref<256x8xbf16, #tpu.memory_space<vmem>>, vector<256x8xbf16>
    %cst = arith.constant dense<0.000000e+00> : vector<128x8xf32>
    %2 = tpu.matmul %0, %1, %cst {dimension_numbers = #tpu.dot_dimension_numbers<[1], [0], [0], [1], [0, 0, 1, 1], [], []>} : vector<128x256xbf16>, vector<256x8xbf16>, vector<128x8xf32> -> vector<128x8xf32>
    %cst_3 = arith.constant dense<0xFF800000> : vector<128xf32>
    %3 = vector.multi_reduction <maximumf>, %2, %cst_3 [1] : vector<128x8xf32> to vector<128xf32>
    %4 = vector.shape_cast %3 : vector<128xf32> to vector<128x1xf32>
    %5 = vector.broadcast %4 : vector<128x1xf32> to vector<128x8xf32>
    %6 = arith.subf %2, %5 : vector<128x8xf32>
    %7 = math.exp %6 : vector<128x8xf32>
    %cst_4 = arith.constant dense<0.000000e+00> : vector<128xf32>
    %8 = vector.multi_reduction <add>, %7, %cst_4 [1] : vector<128x8xf32> to vector<128xf32>
    %9 = vector.shape_cast %8 : vector<128xf32> to vector<128x1xf32>
    %10 = tpu.reciprocal %9 {approx = true} : vector<128x1xf32> -> vector<128x1xf32>
    %11 = arith.mulf %9, %10 : vector<128x1xf32>
    %cst_5 = arith.constant 2.000000e+00 : f32
    %12 = vector.broadcast %cst_5 : f32 to vector<128x1xf32>
    %13 = arith.subf %12, %11 : vector<128x1xf32>
    %14 = arith.mulf %10, %13 : vector<128x1xf32>
    %15 = vector.broadcast %14 : vector<128x1xf32> to vector<128x8xf32>
    %16 = arith.mulf %7, %15 : vector<128x8xf32>
    %17 = arith.truncf %16 : vector<128x8xf32> to vector<128x8xbf16>
    %c0_6 = arith.constant 0 : index
    %c0_7 = arith.constant 0 : index
    %18 = vector.load %arg3[%c0_6, %c0_7] : memref<8x256xbf16, #tpu.memory_space<vmem>>, vector<8x256xbf16>
    %cst_8 = arith.constant dense<0.000000e+00> : vector<128x256xf32>
    %19 = tpu.matmul %17, %18, %cst_8 {dimension_numbers = #tpu.dot_dimension_numbers<[1], [0], [0], [1], [0, 0, 1, 1], [], []>} : vector<128x8xbf16>, vector<8x256xbf16>, vector<128x256xf32> -> vector<128x256xf32>
    %20 = arith.truncf %19 : vector<128x256xf32> to vector<128x256xbf16>
    %21 = arith.mulf %20, %0 : vector<128x256xbf16>
    %c0_9 = arith.constant 0 : index
    %c0_10 = arith.constant 0 : index
    %22 = vector.load %arg4[%c0_9, %c0_10] : memref<256x128xbf16, #tpu.memory_space<vmem>>, vector<256x128xbf16>
    %cst_11 = arith.constant dense<0.000000e+00> : vector<128x128xf32>
    %23 = tpu.matmul %21, %22, %cst_11 {dimension_numbers = #tpu.dot_dimension_numbers<[1], [0], [0], [1], [0, 0, 1, 1], [], []>} : vector<128x256xbf16>, vector<256x128xbf16>, vector<128x128xf32> -> vector<128x128xf32>
    %c0_12 = arith.constant 0 : index
    %c0_13 = arith.constant 0 : index
    %24 = vector.load %arg5[%c0_12, %c0_13] : memref<1x128xf32, #tpu.memory_space<vmem>>, vector<1x128xf32>
    %25 = vector.broadcast %24 : vector<1x128xf32> to vector<128x128xf32>
    %26 = arith.addf %23, %25 : vector<128x128xf32>
    %27 = arith.truncf %26 : vector<128x128xf32> to vector<128x128xbf16>
    %c0_14 = arith.constant 0 : index
    %c0_15 = arith.constant 0 : index
    %28 = vector.load %arg6[%c0_14, %c0_15] : memref<128x128xbf16, #tpu.memory_space<vmem>>, vector<128x128xbf16>
    tpu.vector_store %arg6[%c0_14, %c0_15], %27 {strides = array<i32>} : memref<128x128xbf16, #tpu.memory_space<vmem>>, vector<128x128xbf16>,
    return
  }
  func.func @transform_0(%arg0: i32) -> (i32, i32) {
    %c0_i32 = arith.constant 0 : i32
    %c0_i32_0 = arith.constant 0 : i32
    return %arg0, %c0_i32 : i32, i32
  }
  func.func @transform_1(%arg0: i32) -> (i32, i32) {
    %c0_i32 = arith.constant 0 : i32
    %c0_i32_0 = arith.constant 0 : i32
    %c0_i32_1 = arith.constant 0 : i32
    return %c0_i32, %c0_i32_0 : i32, i32
  }
  func.func @transform_2(%arg0: i32) -> (i32, i32) {
    %c0_i32 = arith.constant 0 : i32
    %c0_i32_0 = arith.constant 0 : i32
    %c0_i32_1 = arith.constant 0 : i32
    return %c0_i32, %c0_i32_0 : i32, i32
  }
  func.func @transform_3(%arg0: i32) -> (i32, i32) {
    %c0_i32 = arith.constant 0 : i32
    %c0_i32_0 = arith.constant 0 : i32
    %c0_i32_1 = arith.constant 0 : i32
    return %c0_i32, %c0_i32_0 : i32, i32
  }
  func.func @transform_4(%arg0: i32) -> (i32, i32) {
    %c0_i32 = arith.constant 0 : i32
    %c0_i32_0 = arith.constant 0 : i32
    %c0_i32_1 = arith.constant 0 : i32
    return %c0_i32, %c0_i32_0 : i32, i32
  }
  func.func @transform_5(%arg0: i32) -> (i32, i32) {
    %c0_i32 = arith.constant 0 : i32
    %c0_i32_0 = arith.constant 0 : i32
    return %arg0, %c0_i32 : i32, i32
  }
}

</mosaic_0001>

<llo_original>
// kernel: tpu_custom_call.1
$region0: #{tpu_custom_call.1}
  #allocation0 [shape = 'u32[]', space=smem, size = 0x4, offset = 0x4, fixed_abs, tag = 'smem constant byte address 0x4 - core index']
  #allocation1 [shape = 'u32[144,128]{1,0:T(1,128)}', space=vmem, size = 0x12000, scoped, tag = 'internal scratch']
  %s0 = inlined_call_operand.hbm [shape: bf16[256,256], index: 0, kind: input, shape index: {}]
  %s1 = inlined_call_operand.vmem [shape: bf16[256,8], index: 1, kind: input, shape index: {}]
  %s2 = inlined_call_operand.vmem [shape: bf16[8,256], index: 2, kind: input, shape index: {}]
  %s3 = inlined_call_operand.vmem [shape: bf16[256,128], index: 3, kind: input, shape index: {}]
  %s4 = inlined_call_operand.vmem [shape: f32[1,128], index: 4, kind: input, shape index: {}]
  %s5 = inlined_call_operand.hbm [shape: bf16[256,128], index: 5, kind: output, shape index: {}]
  %s6 = sld [smem:[#allocation0]]
  $region57: #{tpu_custom_call.1} parent=0
    _
  %s8 = ssub.s32 1, %s6
  %s9 = scalar_select 0, %s8, %s6
  $region1: #{tpu_custom_call.1} parent=0
    #allocation2 [shape = 'u8[131072]{0}', space=vmem, size = 0x20000, scoped, tag = 'input window, operand 0']
    #allocation3 [shape = 's32[2]{0}', space=sflag, size = 0x8, scoped, tag = 'scoped memory for tpu_custom_call.1']
    #allocation4 [shape = 's32[2]{0}', space=sflag, size = 0x8, scoped, tag = 'scoped memory for tpu_custom_call.1']
    #allocation5 [shape = 'u8[65536]{0}', space=vmem, size = 0x10000, scoped, tag = 'output window, operand 0']
    %10 = vsyncpa [#allocation3], 0
    %s11 = scalar_lea.sflag [#allocation3], 1
    %12 = vsyncpa %s11, 0
    %13 = vsyncpa [#allocation4], 0
    %s14 = scalar_lea.sflag [#allocation4], 1
    %15 = vsyncpa %s14, 0
    loop: start=0, step=1, limit=4
    $region2: #{tpu_custom_call.1} parent=1 // loop_pre_header
      _
    $region3: #{tpu_custom_call.1} parent=1 // loop_header
      %s17 = sphi 0, %s21
      %p18 = scmp.ge.s32.totalorder %s17, 4
      %s27 = sphi 0, %s29
      %s30 = sphi 0, %s27
      %s31 = sphi 0, %s30
      %s47 = sphi 0, %s31
      %s51 = sphi 0, %s51
      %s53 = sphi 0, %s51
      %s54 = sphi 0, %s53
      %s68 = sphi 0, %s54
      %s72 = sphi 0, %s72
      %s74 = sphi 0, %s72
      %s75 = sphi 0, %s74
      %s89 = sphi 0, %s75
      %s93 = sphi 0, %s93
      %s95 = sphi 0, %s93
      %s96 = sphi 0, %s95
      %s110 = sphi 0, %s96
      %s114 = sphi 0, %s114
      %s116 = sphi 0, %s114
      %s117 = sphi 0, %s116
      %s131 = sphi 0, %s117
      %s137 = sphi 0, %s139
      %s140 = sphi 0, %s137
      %s141 = sphi 0, %s140
      %s157 = sphi 0, %s141
    $region4: #{tpu_custom_call.1} parent=1 // loop_header_branch
      %20 = sbr.rel (%p18) target = $region8
    $region5: #{tpu_custom_call.1} parent=1 // loop_body
      %s22 = ssub.s32 %s17, 1
      %s23 = ssub.s32 %s17, 2
      %s24 = sadd.s32 %s17, 1
      %s25 = ssub.s32 %s17, %s24
      %p26 = scmp.eq.s32.totalorder %s25, 0
      %s28 = sadd.s32 %s27, 1
      %s29 = scalar_select %p26, %s27, %s28
      %p32 = pneg %p26
      %p33 = scmp.eq.s32.totalorder %s17, 1
      %p34 = por %p32, %p33
      %p35 = scmp.ne.s32.totalorder %s27, %s30
      %p36 = scmp.eq.s32.totalorder %s17, 0
      %p37 = por %p35, %p36
      %p38 = scmp.ne.s32.totalorder %s27, %s30
      %p39 = scmp.eq.s32.totalorder %s22, 1
      %p40 = por %p38, %p39
      %p41 = scmp.ne.s32.totalorder %s30, %s31
      %p42 = scmp.eq.s32.totalorder %s22, 0
      %p43 = por %p41, %p42
      %p44 = scmp.ne.s32.totalorder %s30, %s31
      %p45 = scmp.eq.s32.totalorder %s23, 1
      %p46 = por %p44, %p45
      %p48 = scmp.ne.s32.totalorder %s31, %s47
      %p49 = scmp.eq.s32.totalorder %s23, 0
      %p50 = por %p48, %p49
      %s52 = sadd.s32 %s51, 1
      %p55 = scmp.eq.s32.totalorder %s17, 1
      %p56 = scmp.ne.s32.totalorder %s51, %s53
      %p57 = scmp.eq.s32.totalorder %s17, 0
      %p58 = por %p56, %p57
      %p59 = scmp.ne.s32.totalorder %s51, %s53
      %p60 = scmp.eq.s32.totalorder %s22, 1
      %p61 = por %p59, %p60
      %p62 = scmp.ne.s32.totalorder %s53, %s54
      %p63 = scmp.eq.s32.totalorder %s22, 0
      %p64 = por %p62, %p63
      %p65 = scmp.ne.s32.totalorder %s53, %s54
      %p66 = scmp.eq.s32.totalorder %s23, 1
      %p67 = por %p65, %p66
      %p69 = scmp.ne.s32.totalorder %s54, %s68
      %p70 = scmp.eq.s32.totalorder %s23, 0
      %p71 = por %p69, %p70
      %s73 = sadd.s32 %s72, 1
      %p76 = scmp.eq.s32.totalorder %s17, 1
      %p77 = scmp.ne.s32.totalorder %s72, %s74
      %p78 = scmp.eq.s32.totalorder %s17, 0
      %p79 = por %p77, %p78
      %p80 = scmp.ne.s32.totalorder %s72, %s74
      %p81 = scmp.eq.s32.totalorder %s22, 1
      %p82 = por %p80, %p81
      %p83 = scmp.ne.s32.totalorder %s74, %s75
      %p84 = scmp.eq.s32.totalorder %s22, 0
      %p85 = por %p83, %p84
      %p86 = scmp.ne.s32.totalorder %s74, %s75
      %p87 = scmp.eq.s32.totalorder %s23, 1
      %p88 = por %p86, %p87
      %p90 = scmp.ne.s32.totalorder %s75, %s89
      %p91 = scmp.eq.s32.totalorder %s23, 0
      %p92 = por %p90, %p91
      %s94 = sadd.s32 %s93, 1
      %p97 = scmp.eq.s32.totalorder %s17, 1
      %p98 = scmp.ne.s32.totalorder %s93, %s95
      %p99 = scmp.eq.s32.totalorder %s17, 0
      %p100 = por %p98, %p99
      %p101 = scmp.ne.s32.totalorder %s93, %s95
      %p102 = scmp.eq.s32.totalorder %s22, 1
      %p103 = por %p101, %p102
      %p104 = scmp.ne.s32.totalorder %s95, %s96
      %p105 = scmp.eq.s32.totalorder %s22, 0
      %p106 = por %p104, %p105
      %p107 = scmp.ne.s32.totalorder %s95, %s96
      %p108 = scmp.eq.s32.totalorder %s23, 1
      %p109 = por %p107, %p108
      %p111 = scmp.ne.s32.totalorder %s96, %s110
      %p112 = scmp.eq.s32.totalorder %s23, 0
      %p113 = por %p111, %p112
      %s115 = sadd.s32 %s114, 1
      %p118 = scmp.eq.s32.totalorder %s17, 1
      %p119 = scmp.ne.s32.totalorder %s114, %s116
      %p120 = scmp.eq.s32.totalorder %s17, 0
      %p121 = por %p119, %p120
      %p122 = scmp.ne.s32.totalorder %s114, %s116
      %p123 = scmp.eq.s32.totalorder %s22, 1
      %p124 = por %p122, %p123
      %p125 = scmp.ne.s32.totalorder %s116, %s117
      %p126 = scmp.eq.s32.totalorder %s22, 0
      %p127 = por %p125, %p126
      %p128 = scmp.ne.s32.totalorder %s116, %s117
      %p129 = scmp.eq.s32.totalorder %s23, 1
      %p130 = por %p128, %p129
      %p132 = scmp.ne.s32.totalorder %s117, %s131
      %p133 = scmp.eq.s32.totalorder %s23, 0
      %p134 = por %p132, %p133
      %s135 = ssub.s32 %s17, %s24
      %p136 = scmp.eq.s32.totalorder %s135, 0
      %s138 = sadd.s32 %s137, 1
      %s139 = scalar_select %p136, %s137, %s138
      %p142 = pneg %p136
      %p143 = scmp.eq.s32.totalorder %s17, 1
      %p144 = por %p142, %p143
      %p145 = scmp.ne.s32.totalorder %s137, %s140
      %p146 = scmp.eq.s32.totalorder %s17, 0
      %p147 = por %p145, %p146
      %p148 = scmp.ne.s32.totalorder %s137, %s140
      %p149 = scmp.eq.s32.totalorder %s22, 1
      %p150 = por %p148, %p149
      %p151 = scmp.ne.s32.totalorder %s140, %s141
      %p152 = scmp.eq.s32.totalorder %s22, 0
      %p153 = por %p151, %p152
      %p154 = scmp.ne.s32.totalorder %s140, %s141
      %p155 = scmp.eq.s32.totalorder %s23, 1
      %p156 = por %p154, %p155
      %p158 = scmp.ne.s32.totalorder %s141, %s157
      %p159 = scmp.eq.s32.totalorder %s23, 0
      %p160 = por %p158, %p159
      %p161 = scmp.le.s32.totalorder 1, %s17
      %p162 = scmp.lt.s32.totalorder %s17, 3
      %p163 = pnand %p161, %p162
      %p164 = pneg %p163
      // Predicated region
      $region9: #{tpu_custom_call.1} parent=5 // pred_check
        _
      $region10: #{tpu_custom_call.1} parent=5 // pred_check_branch
        %166 = sbr.rel (%p163) target = $region12
      $region11: #{tpu_custom_call.1} parent=5 // pred_region
        %s167 = ssub.s32 %s17, 1
        // Predicated region
        $region13: #{tpu_custom_call.1} parent=11 // pred_check
          %p168 = pneg %p64
        $region14: #{tpu_custom_call.1} parent=11 // pred_check_branch
          %170 = sbr.rel (%p168) target = $region16
        $region15: #{tpu_custom_call.1} parent=11 // pred_region
          _
        $region16: #{tpu_custom_call.1} parent=11 // pred_fallthru
          _
        // Predicated region
        $region17: #{tpu_custom_call.1} parent=11 // pred_check
          %p171 = pneg %p85
        $region18: #{tpu_custom_call.1} parent=11 // pred_check_branch
          %173 = sbr.rel (%p171) target = $region20
        $region19: #{tpu_custom_call.1} parent=11 // pred_region
          _
        $region20: #{tpu_custom_call.1} parent=11 // pred_fallthru
          _
        // Predicated region
        $region21: #{tpu_custom_call.1} parent=11 // pred_check
          %p174 = pneg %p106
        $region22: #{tpu_custom_call.1} parent=11 // pred_check_branch
          %176 = sbr.rel (%p174) target = $region24
        $region23: #{tpu_custom_call.1} parent=11 // pred_region
          _
        $region24: #{tpu_custom_call.1} parent=11 // pred_fallthru
          _
        // Predicated region
        $region25: #{tpu_custom_call.1} parent=11 // pred_check
          %p177 = pneg %p127
        $region26: #{tpu_custom_call.1} parent=11 // pred_check_branch
          %179 = sbr.rel (%p177) target = $region28
        $region27: #{tpu_custom_call.1} parent=11 // pred_region
          _
        $region28: #{tpu_custom_call.1} parent=11 // pred_fallthru
          _
      $region12: #{tpu_custom_call.1} parent=5 // pred_fallthru
        _
      %p180 = scmp.lt.s32.totalorder %s17, 2
      // Predicated region
      $region29: #{tpu_custom_call.1} parent=5 // pred_check
        %p181 = pneg %p180
      $region30: #{tpu_custom_call.1} parent=5 // pred_check_branch
        %183 = sbr.rel (%p181) target = $region32
      $region31: #{tpu_custom_call.1} parent=5 // pred_region
        // Predicated region
        $region33: #{tpu_custom_call.1} parent=31 // pred_check
          %p184 = pneg %p37
        $region34: #{tpu_custom_call.1} parent=31 // pred_check_branch
          %186 = sbr.rel (%p184) target = $region36
        $region35: #{tpu_custom_call.1} parent=31 // pred_region
          %s187 = sand.u32 %s27, 1
          %s188 = scalar_lea.sflag [#allocation3], %s187
          %s189 = sand.u32 %s27, 1
          %s190 = smul.addr %s189, 128
          %s191 = scalar_lea.vmem [#allocation2], %s190
          %s192 = smul.u32 16, %s17
          %s194 = ssub.s32 2048, 2048
          %195 = vsyncadd %s188, %s194
          %s196 = smul.addr %s192, 2
          %s197 = smul.addr %s196, 64
          %s198 = scalar_lea.hbm %s0, %s197
          %s199 = sshll.u32 %s191, 4
          %s200 = int_to_ptr.vmem [resolvable:$true] %s199
          %205 = dma.hbm_to_vmem [thread:$0]  %s198, 2048, %s200, %s188, 128, 128, 8
        $region36: #{tpu_custom_call.1} parent=31 // pred_fallthru
          _
      $region32: #{tpu_custom_call.1} parent=5 // pred_fallthru
        _
      %p206 = scmp.le.s32.totalorder 1, %s17
      %p207 = scmp.lt.s32.totalorder %s17, 3
      %p208 = pnand %p206, %p207
      %p209 = pneg %p208
      // Predicated region
      $region37: #{tpu_custom_call.1} parent=5 // pred_check
        _
      $region38: #{tpu_custom_call.1} parent=5 // pred_check_branch
        %211 = sbr.rel (%p208) target = $region40
      $region39: #{tpu_custom_call.1} parent=5 // pred_region
        %s212 = ssub.s32 %s17, 1
        %s213 = sand.u32 %s30, 1
        %s214 = scalar_lea.sflag [#allocation3], %s213
        %s215 = sand.u32 %s30, 1
        %s216 = smul.addr %s215, 128
        %s217 = scalar_lea.vmem [#allocation2], %s216
        // Predicated region
        $region41: #{tpu_custom_call.1} parent=39 // pred_check
          %p218 = pneg %p43
        $region42: #{tpu_custom_call.1} parent=39 // pred_check_branch
          %220 = sbr.rel (%p218) target = $region44
        $region43: #{tpu_custom_call.1} parent=39 // pred_region
          %221 = dma.done %s214, 2048
        $region44: #{tpu_custom_call.1} parent=39 // pred_fallthru
          _
        %s222 = sand.u32 %s30, 1
        %s223 = scalar_lea.sflag [#allocation3], %s222
        %s224 = sand.u32 %s30, 1
        %s225 = smul.addr %s224, 128
        %s226 = scalar_lea.vmem [#allocation2], %s225
        %p227 = pneg %p43
        %p228 = pneg %p40
        %p229 = pneg %p64
        %p230 = pneg %p61
        %p231 = pneg %p85
        %p232 = pneg %p82
        %p233 = pneg %p106
        %p234 = pneg %p103
        %p235 = pneg %p127
        %p236 = pneg %p124
        %p237 = pneg %p153
        %p238 = pneg %p150
        %s239 = sand.u32 %s140, 1
        %s240 = scalar_lea.sflag [#allocation4], %s239
        %s241 = sand.u32 %s140, 1
        %s242 = smul.addr %s241, 64
        %s243 = scalar_lea.vmem [#allocation5], %s242
        %s244 = smul.u32 16, %s22
        %s245 = smul.u32 16, %s22
        %v247 = vld [vmem:[%s217] sm:$0xff]
        %v248 = vld [vmem:[%s217 + $0x8] sm:$0xff]
        %v249 = vld [vmem:[%s217 + $0x10] sm:$0xff]
        %v250 = vld [vmem:[%s217 + $0x18] sm:$0xff]
        %v251 = vld [vmem:[%s217 + $0x20] sm:$0xff]
        %v252 = vld [vmem:[%s217 + $0x28] sm:$0xff]
        %v253 = vld [vmem:[%s217 + $0x30] sm:$0xff]
        %v254 = vld [vmem:[%s217 + $0x38] sm:$0xff]
        %v255 = vld [vmem:[%s217 + $0x40] sm:$0xff]
        %v256 = vld [vmem:[%s217 + $0x48] sm:$0xff]
        %v257 = vld [vmem:[%s217 + $0x50] sm:$0xff]
        %v258 = vld [vmem:[%s217 + $0x58] sm:$0xff]
        %v259 = vld [vmem:[%s217 + $0x60] sm:$0xff]
        %v260 = vld [vmem:[%s217 + $0x68] sm:$0xff]
        %v261 = vld [vmem:[%s217 + $0x70] sm:$0xff]
        %v262 = vld [vmem:[%s217 + $0x78] sm:$0xff]
        %v263 = vld [vmem:[%s1] sm:$0xf]
        %v264 = vld [vmem:[%s1 + $0x4] sm:$0xf]
        %v265 = vld [vmem:[%s1 + $0x8] sm:$0xf]
        %v266 = vld [vmem:[%s1 + $0xc] sm:$0xf]
        %v267 = vld [vmem:[%s1 + $0x10] sm:$0xf]
        %v268 = vld [vmem:[%s1 + $0x14] sm:$0xf]
        %v269 = vld [vmem:[%s1 + $0x18] sm:$0xf]
        %v270 = vld [vmem:[%s1 + $0x1c] sm:$0xf]
        %v271 = vld [vmem:[%s1 + $0x20] sm:$0xf]
        %v272 = vld [vmem:[%s1 + $0x24] sm:$0xf]
        %v273 = vld [vmem:[%s1 + $0x28] sm:$0xf]
        %v274 = vld [vmem:[%s1 + $0x2c] sm:$0xf]
        %v275 = vld [vmem:[%s1 + $0x30] sm:$0xf]
        %v276 = vld [vmem:[%s1 + $0x34] sm:$0xf]
        %v277 = vld [vmem:[%s1 + $0x38] sm:$0xf]
        %v278 = vld [vmem:[%s1 + $0x3c] sm:$0xf]
        %v279 = vld [vmem:[%s1 + $0x40] sm:$0xf]
        %v280 = vld [vmem:[%s1 + $0x44] sm:$0xf]
        %v281 = vld [vmem:[%s1 + $0x48] sm:$0xf]
        %v282 = vld [vmem:[%s1 + $0x4c] sm:$0xf]
        %v283 = vld [vmem:[%s1 + $0x50] sm:$0xf]
        %v284 = vld [vmem:[%s1 + $0x54] sm:$0xf]
        %v285 = vld [vmem:[%s1 + $0x58] sm:$0xf]
        %v286 = vld [vmem:[%s1 + $0x5c] sm:$0xf]
        %v287 = vld [vmem:[%s1 + $0x60] sm:$0xf]
        %v288 = vld [vmem:[%s1 + $0x64] sm:$0xf]
        %v289 = vld [vmem:[%s1 + $0x68] sm:$0xf]
        %v290 = vld [vmem:[%s1 + $0x6c] sm:$0xf]
        %v291 = vld [vmem:[%s1 + $0x70] sm:$0xf]
        %v292 = vld [vmem:[%s1 + $0x74] sm:$0xf]
        %v293 = vld [vmem:[%s1 + $0x78] sm:$0xf]
        %v294 = vld [vmem:[%s1 + $0x7c] sm:$0xf]
        %v311 = vunpack.c.l.b16 %v247
        %v312 = vunpack.c.h.b16 %v247
        %v313 = vunpack.c.l.b16 %v248
        %v314 = vunpack.c.h.b16 %v248
        %v315 = vunpack.c.l.b16 %v249
        %v316 = vunpack.c.h.b16 %v249
        %v317 = vunpack.c.l.b16 %v250
        %v318 = vunpack.c.h.b16 %v250
        %v319 = vunpack.c.l.b16 %v251
        %v320 = vunpack.c.h.b16 %v251
        %v321 = vunpack.c.l.b16 %v252
        %v322 = vunpack.c.h.b16 %v252
        %v323 = vunpack.c.l.b16 %v253
        %v324 = vunpack.c.h.b16 %v253
        %v325 = vunpack.c.l.b16 %v254
        %v326 = vunpack.c.h.b16 %v254
        %v327 = vunpack.c.l.b16 %v255
        %v328 = vunpack.c.h.b16 %v255
        %v329 = vunpack.c.l.b16 %v256
        %v330 = vunpack.c.h.b16 %v256
        %v331 = vunpack.c.l.b16 %v257
        %v332 = vunpack.c.h.b16 %v257
        %v333 = vunpack.c.l.b16 %v258
        %v334 = vunpack.c.h.b16 %v258
        %v335 = vunpack.c.l.b16 %v259
        %v336 = vunpack.c.h.b16 %v259
        %v337 = vunpack.c.l.b16 %v260
        %v338 = vunpack.c.h.b16 %v260
        %v339 = vunpack.c.l.b16 %v261
        %v340 = vunpack.c.h.b16 %v261
        %v341 = vunpack.c.l.b16 %v262
        %v342 = vunpack.c.h.b16 %v262
        %v343 = vpack.c.b16 %v313, %v311
        %v344 = vpack.c.b16 %v314, %v312
        %v345 = vpack.c.b16 %v317, %v315
        %v346 = vpack.c.b16 %v318, %v316
        %v347 = vpack.c.b16 %v321, %v319
        %v348 = vpack.c.b16 %v322, %v320
        %v349 = vpack.c.b16 %v325, %v323
        %v350 = vpack.c.b16 %v326, %v324
        %v351 = vpack.c.b16 %v329, %v327
        %v352 = vpack.c.b16 %v330, %v328
        %v353 = vpack.c.b16 %v333, %v331
        %v354 = vpack.c.b16 %v334, %v332
        %v355 = vpack.c.b16 %v337, %v335
        %v356 = vpack.c.b16 %v338, %v336
        %v357 = vpack.c.b16 %v341, %v339
        %v358 = vpack.c.b16 %v342, %v340
        %v407 = vunpack.c.l.b16 %v263
        %v408 = vunpack.c.l.b16 %v264
        %v409 = vunpack.c.l.b16 %v265
        %v410 = vunpack.c.l.b16 %v266
        %v411 = vunpack.c.l.b16 %v267
        %v412 = vunpack.c.l.b16 %v268
        %v413 = vunpack.c.l.b16 %v269
        %v414 = vunpack.c.l.b16 %v270
        %v415 = vunpack.c.l.b16 %v271
        %v416 = vunpack.c.l.b16 %v272
        %v417 = vunpack.c.l.b16 %v273
        %v418 = vunpack.c.l.b16 %v274
        %v419 = vunpack.c.l.b16 %v275
        %v420 = vunpack.c.l.b16 %v276
        %v421 = vunpack.c.l.b16 %v277
        %v422 = vunpack.c.l.b16 %v278
        %v423 = vunpack.c.l.b16 %v279
        %v424 = vunpack.c.l.b16 %v280
        %v425 = vunpack.c.l.b16 %v281
        %v426 = vunpack.c.l.b16 %v282
        %v427 = vunpack.c.l.b16 %v283
        %v428 = vunpack.c.l.b16 %v284
        %v429 = vunpack.c.l.b16 %v285
        %v430 = vunpack.c.l.b16 %v286
        %v431 = vunpack.c.l.b16 %v287
        %v432 = vunpack.c.l.b16 %v288
        %v433 = vunpack.c.l.b16 %v289
        %v434 = vunpack.c.l.b16 %v290
        %v435 = vunpack.c.l.b16 %v291
        %v436 = vunpack.c.l.b16 %v292
        %v437 = vunpack.c.l.b16 %v293
        %v438 = vunpack.c.l.b16 %v294
        %v439 = vpack.c.b16 %v408, %v407
        %v440 = vpack.c.b16 %v410, %v409
        %v441 = vpack.c.b16 %v412, %v411
        %v442 = vpack.c.b16 %v414, %v413
        %v443 = vpack.c.b16 %v416, %v415
        %v444 = vpack.c.b16 %v418, %v417
        %v445 = vpack.c.b16 %v420, %v419
        %v446 = vpack.c.b16 %v422, %v421
        %v447 = vpack.c.b16 %v424, %v423
        %v448 = vpack.c.b16 %v426, %v425
        %v449 = vpack.c.b16 %v428, %v427
        %v450 = vpack.c.b16 %v430, %v429
        %v451 = vpack.c.b16 %v432, %v431
        %v452 = vpack.c.b16 %v434, %v433
        %v453 = vpack.c.b16 %v436, %v435
        %v454 = vpack.c.b16 %v438, %v437
        %471 = vmatprep.subr.bf16.mxu0 0
        %472 = vmatpush1.bf16.msra.mxu0 %v439
        %473 = vmatprep.subr.bf16.mxu0 0
        %474 = vmatpush1.bf16.msra.mxu0 %v440
        %475 = vmatprep.subr.bf16.mxu0 0
        %476 = vmatpush1.bf16.msra.mxu0 %v441
        %477 = vmatprep.subr.bf16.mxu0 0
        %478 = vmatpush1.bf16.msra.mxu0 %v442
        %479 = vmatprep.subr.bf16.mxu0 0
        %480 = vmatpush1.bf16.msra.mxu0 %v443
        %481 = vmatprep.subr.bf16.mxu0 0
        %482 = vmatpush1.bf16.msra.mxu0 %v444
        %483 = vmatprep.subr.bf16.mxu0 0
        %484 = vmatpush1.bf16.msra.mxu0 %v445
        %485 = vmatprep.subr.bf16.mxu0 0
        %486 = vmatpush1.bf16.msra.mxu0 %v446
        %487 = vmatprep.subr.bf16.mxu0 0
        %488 = vmatpush1.bf16.msra.mxu0 %v447
        %489 = vmatprep.subr.bf16.mxu0 0
        %490 = vmatpush1.bf16.msra.mxu0 %v448
        %491 = vmatprep.subr.bf16.mxu0 0
        %492 = vmatpush1.bf16.msra.mxu0 %v449
        %493 = vmatprep.subr.bf16.mxu0 0
        %494 = vmatpush1.bf16.msra.mxu0 %v450
        %495 = vmatprep.subr.bf16.mxu0 0
        %496 = vmatpush1.bf16.msra.mxu0 %v451
        %497 = vmatprep.subr.bf16.mxu0 0
        %498 = vmatpush1.bf16.msra.mxu0 %v452
        %499 = vmatprep.subr.bf16.mxu0 0
        %500 = vmatpush1.bf16.msra.mxu0 %v453
        %501 = vmatprep.subr.bf16.mxu0 0
        %502 = vmatpush1.bf16.msra.mxu0 %v454
        %503 = vmatprep.mubr.bf16.mxu0 %v344
        %504 = vmatmul.mubr.bf16.gmra.mrb[0].mxu0 %v343
        %v505 = vpop.f32.mrb[0].mxu0
        %v506 = vadd.f32 0.0, %v505
        %v507 = vpop.f32.mrb[0].mxu0
        %v508 = vpop.f32.mrb[0].mxu0
        %v509 = vadd.f32 0.0, %v508
        %v510 = vpop.f32.mrb[0].mxu0
        %511 = vmatprep.mubr.bf16.mxu0 %v346
        %512 = vmatmul.mubr.bf16.gmra.mrb[0].mxu0 %v345
        %v513 = vpop.f32.mrb[0].mxu0
        %v514 = vadd.f32 0.0, %v513
        %v515 = vpop.f32.mrb[0].mxu0
        %v516 = vpop.f32.mrb[0].mxu0
        %v517 = vadd.f32 0.0, %v516
        %v518 = vpop.f32.mrb[0].mxu0
        %519 = vmatprep.mubr.bf16.mxu0 %v348
        %520 = vmatmul.mubr.bf16.gmra.mrb[0].mxu0 %v347
        %v521 = vpop.f32.mrb[0].mxu0
        %v522 = vadd.f32 0.0, %v521
        %v523 = vpop.f32.mrb[0].mxu0
        %v524 = vpop.f32.mrb[0].mxu0
        %v525 = vadd.f32 0.0, %v524
        %v526 = vpop.f32.mrb[0].mxu0
        %527 = vmatprep.mubr.bf16.mxu0 %v350
        %528 = vmatmul.mubr.bf16.gmra.mrb[0].mxu0 %v349
        %v529 = vpop.f32.mrb[0].mxu0
        %v530 = vadd.f32 0.0, %v529
        %v531 = vpop.f32.mrb[0].mxu0
        %v532 = vpop.f32.mrb[0].mxu0
        %v533 = vadd.f32 0.0, %v532
        %v534 = vpop.f32.mrb[0].mxu0
        %535 = vmatprep.mubr.bf16.mxu0 %v352
        %536 = vmatmul.mubr.bf16.gmra.mrb[0].mxu0 %v351
        %v537 = vpop.f32.mrb[0].mxu0
        %v538 = vadd.f32 0.0, %v537
        %v539 = vpop.f32.mrb[0].mxu0
        %v540 = vpop.f32.mrb[0].mxu0
        %v541 = vadd.f32 0.0, %v540
        %v542 = vpop.f32.mrb[0].mxu0
        %543 = vmatprep.mubr.bf16.mxu0 %v354
        %544 = vmatmul.mubr.bf16.gmra.mrb[0].mxu0 %v353
        %v545 = vpop.f32.mrb[0].mxu0
        %v546 = vadd.f32 0.0, %v545
        %v547 = vpop.f32.mrb[0].mxu0
        %v548 = vpop.f32.mrb[0].mxu0
        %v549 = vadd.f32 0.0, %v548
        %v550 = vpop.f32.mrb[0].mxu0
        %551 = vmatprep.mubr.bf16.mxu0 %v356
        %552 = vmatmul.mubr.bf16.gmra.mrb[0].mxu0 %v355
        %v553 = vpop.f32.mrb[0].mxu0
        %v554 = vadd.f32 0.0, %v553
        %v555 = vpop.f32.mrb[0].mxu0
        %v556 = vpop.f32.mrb[0].mxu0
        %v557 = vadd.f32 0.0, %v556
        %v558 = vpop.f32.mrb[0].mxu0
        %559 = vmatprep.mubr.bf16.mxu0 %v358
        %560 = vmatmul.mubr.bf16.gmra.mrb[0].mxu0 %v357
        %v561 = vpop.f32.mrb[0].mxu0
        %v562 = vadd.f32 0.0, %v561
        %v563 = vpop.f32.mrb[0].mxu0
        %v564 = vpop.f32.mrb[0].mxu0
        %v565 = vadd.f32 0.0, %v564
        %v566 = vpop.f32.mrb[0].mxu0
        %567 = vdwg.mxu0
        %vm568 = vcmask 64512
        %v569 = vsel %vm568, %v506, -inf
        %570 = vmax.xlane.f32.xlu0 %v569
        %v571 = vpop.xlane.xlu0 %570
        %v572 = vsel %vm568, %v509, -inf
        %573 = vmax.xlane.f32.xlu0 %v572
        %v574 = vpop.xlane.xlu0 %573
        %v575 = vsel %vm568, %v514, -inf
        %576 = vmax.xlane.f32.xlu0 %v575
        %v577 = vpop.xlane.xlu0 %576
        %v578 = vsel %vm568, %v517, -inf
        %579 = vmax.xlane.f32.xlu0 %v578
        %v580 = vpop.xlane.xlu0 %579
        %v581 = vsel %vm568, %v522, -inf
        %582 = vmax.xlane.f32.xlu0 %v581
        %v583 = vpop.xlane.xlu0 %582
        %v584 = vsel %vm568, %v525, -inf
        %585 = vmax.xlane.f32.xlu0 %v584
        %v586 = vpop.xlane.xlu0 %585
        %v587 = vsel %vm568, %v530, -inf
        %588 = vmax.xlane.f32.xlu0 %v587
        %v589 = vpop.xlane.xlu0 %588
        %v590 = vsel %vm568, %v533, -inf
        %591 = vmax.xlane.f32.xlu0 %v590
        %v592 = vpop.xlane.xlu0 %591
        %v593 = vsel %vm568, %v538, -inf
        %594 = vmax.xlane.f32.xlu0 %v593
        %v595 = vpop.xlane.xlu0 %594
        %v596 = vsel %vm568, %v541, -inf
        %597 = vmax.xlane.f32.xlu0 %v596
        %v598 = vpop.xlane.xlu0 %597
        %v599 = vsel %vm568, %v546, -inf
        %600 = vmax.xlane.f32.xlu0 %v599
        %v601 = vpop.xlane.xlu0 %600
        %v602 = vsel %vm568, %v549, -inf
        %603 = vmax.xlane.f32.xlu0 %v602
        %v604 = vpop.xlane.xlu0 %603
        %v605 = vsel %vm568, %v554, -inf
        %606 = vmax.xlane.f32.xlu0 %v605
        %v607 = vpop.xlane.xlu0 %606
        %v608 = vsel %vm568, %v557, -inf
        %609 = vmax.xlane.f32.xlu0 %v608
        %v610 = vpop.xlane.xlu0 %609
        %v611 = vsel %vm568, %v562, -inf
        %612 = vmax.xlane.f32.xlu0 %v611
        %v613 = vpop.xlane.xlu0 %612
        %v614 = vsel %vm568, %v565, -inf
        %615 = vmax.xlane.f32.xlu0 %v614
        %v616 = vpop.xlane.xlu0 %615
        %v617 = vsub.f32 %v506, %v571
        %v618 = vsub.f32 %v509, %v574
        %v619 = vsub.f32 %v514, %v577
        %v620 = vsub.f32 %v517, %v580
        %v621 = vsub.f32 %v522, %v583
        %v622 = vsub.f32 %v525, %v586
        %v623 = vsub.f32 %v530, %v589
        %v624 = vsub.f32 %v533, %v592
        %v625 = vsub.f32 %v538, %v595
        %v626 = vsub.f32 %v541, %v598
        %v627 = vsub.f32 %v546, %v601
        %v628 = vsub.f32 %v549, %v604
        %v629 = vsub.f32 %v554, %v607
        %v630 = vsub.f32 %v557, %v610
        %v631 = vsub.f32 %v562, %v613
        %v632 = vsub.f32 %v565, %v616
        %v633 = vmul.f32 %v617, 1.442695
        %v634 = vpow.pop %v633
        %v635 = vmul.f32 %v618, 1.442695
        %v636 = vpow.pop %v635
        %v637 = vmul.f32 %v619, 1.442695
        %v638 = vpow.pop %v637
        %v639 = vmul.f32 %v620, 1.442695
        %v640 = vpow.pop %v639
        %v641 = vmul.f32 %v621, 1.442695
        %v642 = vpow.pop %v641
        %v643 = vmul.f32 %v622, 1.442695
        %v644 = vpow.pop %v643
        %v645 = vmul.f32 %v623, 1.442695
        %v646 = vpow.pop %v645
        %v647 = vmul.f32 %v624, 1.442695
        %v648 = vpow.pop %v647
        %v649 = vmul.f32 %v625, 1.442695
        %v650 = vpow.pop %v649
        %v651 = vmul.f32 %v626, 1.442695
        %v652 = vpow.pop %v651
        %v653 = vmul.f32 %v627, 1.442695
        %v654 = vpow.pop %v653
        %v655 = vmul.f32 %v628, 1.442695
        %v656 = vpow.pop %v655
        %v657 = vmul.f32 %v629, 1.442695
        %v658 = vpow.pop %v657
        %v659 = vmul.f32 %v630, 1.442695
        %v660 = vpow.pop %v659
        %v661 = vmul.f32 %v631, 1.442695
        %v662 = vpow.pop %v661
        %v663 = vmul.f32 %v632, 1.442695
        %v664 = vpow.pop %v663
        %v665 = vsel %vm568, %v634, 0.0
        %666 = vadd.xlane.f32.xlu0 %v665
        %v667 = vpop.xlane.xlu0 %666
        %v668 = vsel %vm568, %v636, 0.0
        %669 = vadd.xlane.f32.xlu0 %v668
        %v670 = vpop.xlane.xlu0 %669
        %v671 = vsel %vm568, %v638, 0.0
        %672 = vadd.xlane.f32.xlu0 %v671
        %v673 = vpop.xlane.xlu0 %672
        %v674 = vsel %vm568, %v640, 0.0
        %675 = vadd.xlane.f32.xlu0 %v674
        %v676 = vpop.xlane.xlu0 %675
        %v677 = vsel %vm568, %v642, 0.0
        %678 = vadd.xlane.f32.xlu0 %v677
        %v679 = vpop.xlane.xlu0 %678
        %v680 = vsel %vm568, %v644, 0.0
        %681 = vadd.xlane.f32.xlu0 %v680
        %v682 = vpop.xlane.xlu0 %681
        %v683 = vsel %vm568, %v646, 0.0
        %684 = vadd.xlane.f32.xlu0 %v683
        %v685 = vpop.xlane.xlu0 %684
        %v686 = vsel %vm568, %v648, 0.0
        %687 = vadd.xlane.f32.xlu0 %v686
        %v688 = vpop.xlane.xlu0 %687
        %v689 = vsel %vm568, %v650, 0.0
        %690 = vadd.xlane.f32.xlu0 %v689
        %v691 = vpop.xlane.xlu0 %690
        %v692 = vsel %vm568, %v652, 0.0
        %693 = vadd.xlane.f32.xlu0 %v692
        %v694 = vpop.xlane.xlu0 %693
        %v695 = vsel %vm568, %v654, 0.0
        %696 = vadd.xlane.f32.xlu0 %v695
        %v697 = vpop.xlane.xlu0 %696
        %v698 = vsel %vm568, %v656, 0.0
        %699 = vadd.xlane.f32.xlu0 %v698
        %v700 = vpop.xlane.xlu0 %699
        %v701 = vsel %vm568, %v658, 0.0
        %702 = vadd.xlane.f32.xlu0 %v701
        %v703 = vpop.xlane.xlu0 %702
        %v704 = vsel %vm568, %v660, 0.0
        %705 = vadd.xlane.f32.xlu0 %v704
        %v706 = vpop.xlane.xlu0 %705
        %v707 = vsel %vm568, %v662, 0.0
        %708 = vadd.xlane.f32.xlu0 %v707
        %v709 = vpop.xlane.xlu0 %708
        %v710 = vsel %vm568, %v664, 0.0
        %711 = vadd.xlane.f32.xlu0 %v710
        %v712 = vpop.xlane.xlu0 %711
        %v713 = vrcp.pop %v667
        %v714 = vrcp.pop %v670
        %v715 = vrcp.pop %v673
        %v716 = vrcp.pop %v676
        %v717 = vrcp.pop %v679
        %v718 = vrcp.pop %v682
        %v719 = vrcp.pop %v685
        %v720 = vrcp.pop %v688
        %v721 = vrcp.pop %v691
        %v722 = vrcp.pop %v694
        %v723 = vrcp.pop %v697
        %v724 = vrcp.pop %v700
        %v725 = vrcp.pop %v703
        %v726 = vrcp.pop %v706
        %v727 = vrcp.pop %v709
        %v728 = vrcp.pop %v712
        %v729 = vmul.f32 %v667, %v713
        %v730 = vmul.f32 %v670, %v714
        %v731 = vmul.f32 %v673, %v715
        %v732 = vmul.f32 %v676, %v716
        %v733 = vmul.f32 %v679, %v717
        %v734 = vmul.f32 %v682, %v718
        %v735 = vmul.f32 %v685, %v719
        %v736 = vmul.f32 %v688, %v720
        %v737 = vmul.f32 %v691, %v721
        %v738 = vmul.f32 %v694, %v722
        %v739 = vmul.f32 %v697, %v723
        %v740 = vmul.f32 %v700, %v724
        %v741 = vmul.f32 %v703, %v725
        %v742 = vmul.f32 %v706, %v726
        %v743 = vmul.f32 %v709, %v727
        %v744 = vmul.f32 %v712, %v728
        %v745 = vsub.f32 2.0, %v729
        %v746 = vsub.f32 2.0, %v730
        %v747 = vsub.f32 2.0, %v731
        %v748 = vsub.f32 2.0, %v732
        %v749 = vsub.f32 2.0, %v733
        %v750 = vsub.f32 2.0, %v734
        %v751 = vsub.f32 2.0, %v735
        %v752 = vsub.f32 2.0, %v736
        %v753 = vsub.f32 2.0, %v737
        %v754 = vsub.f32 2.0, %v738
        %v755 = vsub.f32 2.0, %v739
        %v756 = vsub.f32 2.0, %v740
        %v757 = vsub.f32 2.0, %v741
        %v758 = vsub.f32 2.0, %v742
        %v759 = vsub.f32 2.0, %v743
        %v760 = vsub.f32 2.0, %v744
        %v761 = vmul.f32 %v713, %v745
        %v762 = vmul.f32 %v714, %v746
        %v763 = vmul.f32 %v715, %v747
        %v764 = vmul.f32 %v716, %v748
        %v765 = vmul.f32 %v717, %v749
        %v766 = vmul.f32 %v718, %v750
        %v767 = vmul.f32 %v719, %v751
        %v768 = vmul.f32 %v720, %v752
        %v769 = vmul.f32 %v721, %v753
        %v770 = vmul.f32 %v722, %v754
        %v771 = vmul.f32 %v723, %v755
        %v772 = vmul.f32 %v724, %v756
        %v773 = vmul.f32 %v725, %v757
        %v774 = vmul.f32 %v726, %v758
        %v775 = vmul.f32 %v727, %v759
        %v776 = vmul.f32 %v728, %v760
        %v777 = vmul.f32 %v634, %v761
        %v778 = vmul.f32 %v636, %v762
        %v779 = vmul.f32 %v638, %v763
        %v780 = vmul.f32 %v640, %v764
        %v781 = vmul.f32 %v642, %v765
        %v782 = vmul.f32 %v644, %v766
        %v783 = vmul.f32 %v646, %v767
        %v784 = vmul.f32 %v648, %v768
        %v785 = vmul.f32 %v650, %v769
        %v786 = vmul.f32 %v652, %v770
        %v787 = vmul.f32 %v654, %v771
        %v788 = vmul.f32 %v656, %v772
        %v789 = vmul.f32 %v658, %v773
        %v790 = vmul.f32 %v660, %v774
        %v791 = vmul.f32 %v662, %v775
        %v792 = vmul.f32 %v664, %v776
        %v793 = vpack.c.bf16 %v778, %v777
        %v794 = vpack.c.bf16 %v780, %v779
        %v795 = vpack.c.bf16 %v782, %v781
        %v796 = vpack.c.bf16 %v784, %v783
        %v797 = vpack.c.bf16 %v786, %v785
        %v798 = vpack.c.bf16 %v788, %v787
        %v799 = vpack.c.bf16 %v790, %v789
        %v800 = vpack.c.bf16 %v792, %v791
        %v801 = vld [vmem:[%s2] sm:$0xff]
        %v803 = vunpack.c.l.b16 %v801
        %v804 = vunpack.c.h.b16 %v801
        %v805 = vpack.c.b16 %v803, %v803
        %v806 = vpack.c.b16 %v804, %v804
        %v808 = vsel %vm568, %v793, 0
        %v811 = vsel %vm568, %v794, 0
        %v814 = vsel %vm568, %v795, 0
        %v817 = vsel %vm568, %v796, 0
        %v820 = vsel %vm568, %v797, 0
        %v823 = vsel %vm568, %v798, 0
        %v826 = vsel %vm568, %v799, 0
        %v829 = vsel %vm568, %v800, 0
        %vm831 = vcmask 1043456
        %v833 = vsel %vm831, %v805, 0
        %v836 = vsel %vm831, %v806, 0
        %838 = vmatprep.subr.bf16.mxu0 %v836
        %839 = vmatpush1.bf16.msra.mxu0 %v833
        %840 = vmatprep.subr.bf16.mxu0 0
        %841 = vmatpush1.bf16.msra.mxu0 0
        %842 = vmatprep.subr.bf16.mxu0 0
        %843 = vmatpush1.bf16.msra.mxu0 0
        %844 = vmatprep.subr.bf16.mxu0 0
        %845 = vmatpush1.bf16.msra.mxu0 0
        %846 = vmatprep.subr.bf16.mxu0 0
        %847 = vmatpush1.bf16.msra.mxu0 0
        %848 = vmatprep.subr.bf16.mxu0 0
        %849 = vmatpush1.bf16.msra.mxu0 0
        %850 = vmatprep.subr.bf16.mxu0 0
        %851 = vmatpush1.bf16.msra.mxu0 0
        %852 = vmatprep.subr.bf16.mxu0 0
        %853 = vmatpush1.bf16.msra.mxu0 0
        %854 = vmatprep.subr.bf16.mxu0 0
        %855 = vmatpush1.bf16.msra.mxu0 0
        %856 = vmatprep.subr.bf16.mxu0 0
        %857 = vmatpush1.bf16.msra.mxu0 0
        %858 = vmatprep.subr.bf16.mxu0 0
        %859 = vmatpush1.bf16.msra.mxu0 0
        %860 = vmatprep.subr.bf16.mxu0 0
        %861 = vmatpush1.bf16.msra.mxu0 0
        %862 = vmatprep.subr.bf16.mxu0 0
        %863 = vmatpush1.bf16.msra.mxu0 0
        %864 = vmatprep.subr.bf16.mxu0 0
        %865 = vmatpush1.bf16.msra.mxu0 0
        %866 = vmatprep.subr.bf16.mxu0 0
        %867 = vmatpush1.bf16.msra.mxu0 0
        %868 = vmatprep.subr.bf16.mxu0 0
        %869 = vmatpush1.bf16.msra.mxu0 0
        %870 = vmatprep.mubr.bf16.mxu0 0
        %871 = vmatmul.mubr.bf16.gmra.mrb[0].mxu0 %v808
        %v872 = vpop.f32.mrb[0].mxu0
        %v873 = vadd.f32 0.0, %v872
        %v874 = vpop.f32.mrb[0].mxu0
        %v875 = vadd.f32 0.0, %v874
        %v876 = vpop.f32.mrb[0].mxu0
        %v877 = vadd.f32 0.0, %v876
        %v878 = vpop.f32.mrb[0].mxu0
        %v879 = vadd.f32 0.0, %v878
        %880 = vmatprep.mubr.bf16.mxu0 0
        %881 = vmatmul.mubr.bf16.gmra.mrb[0].mxu0 %v811
        %v882 = vpop.f32.mrb[0].mxu0
        %v883 = vadd.f32 0.0, %v882
        %v884 = vpop.f32.mrb[0].mxu0
        %v885 = vadd.f32 0.0, %v884
        %v886 = vpop.f32.mrb[0].mxu0
        %v887 = vadd.f32 0.0, %v886
        %v888 = vpop.f32.mrb[0].mxu0
        %v889 = vadd.f32 0.0, %v888
        %890 = vmatprep.mubr.bf16.mxu0 0
        %891 = vmatmul.mubr.bf16.gmra.mrb[0].mxu0 %v814
        %v892 = vpop.f32.mrb[0].mxu0
        %v893 = vadd.f32 0.0, %v892
        %v894 = vpop.f32.mrb[0].mxu0
        %v895 = vadd.f32 0.0, %v894
        %v896 = vpop.f32.mrb[0].mxu0
        %v897 = vadd.f32 0.0, %v896
        %v898 = vpop.f32.mrb[0].mxu0
        %v899 = vadd.f32 0.0, %v898
        %900 = vmatprep.mubr.bf16.mxu0 0
        %901 = vmatmul.mubr.bf16.gmra.mrb[0].mxu0 %v817
        %v902 = vpop.f32.mrb[0].mxu0
        %v903 = vadd.f32 0.0, %v902
        %v904 = vpop.f32.mrb[0].mxu0
        %v905 = vadd.f32 0.0, %v904
        %v906 = vpop.f32.mrb[0].mxu0
        %v907 = vadd.f32 0.0, %v906
        %v908 = vpop.f32.mrb[0].mxu0
        %v909 = vadd.f32 0.0, %v908
        %910 = vmatprep.mubr.bf16.mxu0 0
        %911 = vmatmul.mubr.bf16.gmra.mrb[0].mxu0 %v820
        %v912 = vpop.f32.mrb[0].mxu0
        %v913 = vadd.f32 0.0, %v912
        %v914 = vpop.f32.mrb[0].mxu0
        %v915 = vadd.f32 0.0, %v914
        %v916 = vpop.f32.mrb[0].mxu0
        %v917 = vadd.f32 0.0, %v916
        %v918 = vpop.f32.mrb[0].mxu0
        %v919 = vadd.f32 0.0, %v918
        %920 = vmatprep.mubr.bf16.mxu0 0
        %921 = vmatmul.mubr.bf16.gmra.mrb[0].mxu0 %v823
        %v922 = vpop.f32.mrb[0].mxu0
        %v923 = vadd.f32 0.0, %v922
        %v924 = vpop.f32.mrb[0].mxu0
        %v925 = vadd.f32 0.0, %v924
        %v926 = vpop.f32.mrb[0].mxu0
        %v927 = vadd.f32 0.0, %v926
        %v928 = vpop.f32.mrb[0].mxu0
        %v929 = vadd.f32 0.0, %v928
        %930 = vmatprep.mubr.bf16.mxu0 0
        %931 = vmatmul.mubr.bf16.gmra.mrb[0].mxu0 %v826
        %v932 = vpop.f32.mrb[0].mxu0
        %v933 = vadd.f32 0.0, %v932
        %v934 = vpop.f32.mrb[0].mxu0
        %v935 = vadd.f32 0.0, %v934
        %v936 = vpop.f32.mrb[0].mxu0
        %v937 = vadd.f32 0.0, %v936
        %v938 = vpop.f32.mrb[0].mxu0
        %v939 = vadd.f32 0.0, %v938
        %940 = vmatprep.mubr.bf16.mxu0 0
        %941 = vmatmul.mubr.bf16.gmra.mrb[0].mxu0 %v829
        %v942 = vpop.f32.mrb[0].mxu0
        %v943 = vadd.f32 0.0, %v942
        %v944 = vpop.f32.mrb[0].mxu0
        %v945 = vadd.f32 0.0, %v944
        %v946 = vpop.f32.mrb[0].mxu0
        %v947 = vadd.f32 0.0, %v946
        %v948 = vpop.f32.mrb[0].mxu0
        %v949 = vadd.f32 0.0, %v948
        %950 = vdwg.mxu0
        %v951 = vpack.c.bf16 %v877, %v873
        %v952 = vpack.c.bf16 %v879, %v875
        %v953 = vpack.c.bf16 %v887, %v883
        %v954 = vpack.c.bf16 %v889, %v885
        %v955 = vpack.c.bf16 %v897, %v893
        %v956 = vpack.c.bf16 %v899, %v895
        %v957 = vpack.c.bf16 %v907, %v903
        %v958 = vpack.c.bf16 %v909, %v905
        %v959 = vpack.c.bf16 %v917, %v913
        %v960 = vpack.c.bf16 %v919, %v915
        %v961 = vpack.c.bf16 %v927, %v923
        %v962 = vpack.c.bf16 %v929, %v925
        %v963 = vpack.c.bf16 %v937, %v933
        %v964 = vpack.c.bf16 %v939, %v935
        %v965 = vpack.c.bf16 %v947, %v943
        %v966 = vpack.c.bf16 %v949, %v945
        %v967 = vmul.bf16 %v951, %v343
        %v968 = vmul.bf16 %v952, %v344
        %v969 = vmul.bf16 %v953, %v345
        %v970 = vmul.bf16 %v954, %v346
        %v971 = vmul.bf16 %v955, %v347
        %v972 = vmul.bf16 %v956, %v348
        %v973 = vmul.bf16 %v957, %v349
        %v974 = vmul.bf16 %v958, %v350
        %v975 = vmul.bf16 %v959, %v351
        %v976 = vmul.bf16 %v960, %v352
        %v977 = vmul.bf16 %v961, %v353
        %v978 = vmul.bf16 %v962, %v354
        %v979 = vmul.bf16 %v963, %v355
        %v980 = vmul.bf16 %v964, %v356
        %v981 = vmul.bf16 %v965, %v357
        %v982 = vmul.bf16 %v966, %v358
        %v983 = vld [vmem:[%s3] sm:$0xf]
        %v984 = vld [vmem:[%s3 + $0x4] sm:$0xf]
        %v985 = vld [vmem:[%s3 + $0x8] sm:$0xf]
        %v986 = vld [vmem:[%s3 + $0xc] sm:$0xf]
        %v987 = vld [vmem:[%s3 + $0x10] sm:$0xf]
        %v988 = vld [vmem:[%s3 + $0x14] sm:$0xf]
        %v989 = vld [vmem:[%s3 + $0x18] sm:$0xf]
        %v990 = vld [vmem:[%s3 + $0x1c] sm:$0xf]
        %v991 = vld [vmem:[%s3 + $0x20] sm:$0xf]
        %v992 = vld [vmem:[%s3 + $0x24] sm:$0xf]
        %v993 = vld [vmem:[%s3 + $0x28] sm:$0xf]
        %v994 = vld [vmem:[%s3 + $0x2c] sm:$0xf]
        %v995 = vld [vmem:[%s3 + $0x30] sm:$0xf]
        %v996 = vld [vmem:[%s3 + $0x34] sm:$0xf]
        %v997 = vld [vmem:[%s3 + $0x38] sm:$0xf]
        %v998 = vld [vmem:[%s3 + $0x3c] sm:$0xf]
        %v999 = vld [vmem:[%s3 + $0x40] sm:$0xf]
        %v1000 = vld [vmem:[%s3 + $0x44] sm:$0xf]
        %v1001 = vld [vmem:[%s3 + $0x48] sm:$0xf]
        %v1002 = vld [vmem:[%s3 + $0x4c] sm:$0xf]
        %v1003 = vld [vmem:[%s3 + $0x50] sm:$0xf]
        %v1004 = vld [vmem:[%s3 + $0x54] sm:$0xf]
        %v1005 = vld [vmem:[%s3 + $0x58] sm:$0xf]
        %v1006 = vld [vmem:[%s3 + $0x5c] sm:$0xf]
        %v1007 = vld [vmem:[%s3 + $0x60] sm:$0xf]
        %v1008 = vld [vmem:[%s3 + $0x64] sm:$0xf]
        %v1009 = vld [vmem:[%s3 + $0x68] sm:$0xf]
        %v1010 = vld [vmem:[%s3 + $0x6c] sm:$0xf]
        %v1011 = vld [vmem:[%s3 + $0x70] sm:$0xf]
        %v1012 = vld [vmem:[%s3 + $0x74] sm:$0xf]
        %v1013 = vld [vmem:[%s3 + $0x78] sm:$0xf]
        %v1014 = vld [vmem:[%s3 + $0x7c] sm:$0xf]
        %v1015 = vld [vmem:[%s4] sm:$0x1]
        %v1017 = vlaneseq
        %v1018 = vshrl.u32 %v1017, 7
        %v1019 = vsub.s32 0, %v1018
        %v1020 = vrot.slane %v1015, %v1019
        %v1054 = vunpack.c.l.b16 %v983
        %v1055 = vunpack.c.l.b16 %v984
        %v1056 = vunpack.c.l.b16 %v985
        %v1057 = vunpack.c.l.b16 %v986
        %v1058 = vunpack.c.l.b16 %v987
        %v1059 = vunpack.c.l.b16 %v988
        %v1060 = vunpack.c.l.b16 %v989
        %v1061 = vunpack.c.l.b16 %v990
        %v1062 = vunpack.c.l.b16 %v991
        %v1063 = vunpack.c.l.b16 %v992
        %v1064 = vunpack.c.l.b16 %v993
        %v1065 = vunpack.c.l.b16 %v994
        %v1066 = vunpack.c.l.b16 %v995
        %v1067 = vunpack.c.l.b16 %v996
        %v1068 = vunpack.c.l.b16 %v997
        %v1069 = vunpack.c.l.b16 %v998
        %v1070 = vunpack.c.l.b16 %v999
        %v1071 = vunpack.c.l.b16 %v1000
        %v1072 = vunpack.c.l.b16 %v1001
        %v1073 = vunpack.c.l.b16 %v1002
        %v1074 = vunpack.c.l.b16 %v1003
        %v1075 = vunpack.c.l.b16 %v1004
        %v1076 = vunpack.c.l.b16 %v1005
        %v1077 = vunpack.c.l.b16 %v1006
        %v1078 = vunpack.c.l.b16 %v1007
        %v1079 = vunpack.c.l.b16 %v1008
        %v1080 = vunpack.c.l.b16 %v1009
        %v1081 = vunpack.c.l.b16 %v1010
        %v1082 = vunpack.c.l.b16 %v1011
        %v1083 = vunpack.c.l.b16 %v1012
        %v1084 = vunpack.c.l.b16 %v1013
        %v1085 = vunpack.c.l.b16 %v1014
        %v1086 = vpack.c.b16 %v1055, %v1054
        %v1087 = vpack.c.b16 %v1057, %v1056
        %v1088 = vpack.c.b16 %v1059, %v1058
        %v1089 = vpack.c.b16 %v1061, %v1060
        %v1090 = vpack.c.b16 %v1063, %v1062
        %v1091 = vpack.c.b16 %v1065, %v1064
        %v1092 = vpack.c.b16 %v1067, %v1066
        %v1093 = vpack.c.b16 %v1069, %v1068
        %v1094 = vpack.c.b16 %v1071, %v1070
        %v1095 = vpack.c.b16 %v1073, %v1072
        %v1096 = vpack.c.b16 %v1075, %v1074
        %v1097 = vpack.c.b16 %v1077, %v1076
        %v1098 = vpack.c.b16 %v1079, %v1078
        %v1099 = vpack.c.b16 %v1081, %v1080
        %v1100 = vpack.c.b16 %v1083, %v1082
        %v1101 = vpack.c.b16 %v1085, %v1084
        %1118 = vmatprep.subr.bf16.mxu0 0
        %1119 = vmatpush1.bf16.msra.mxu0 %v1086
        %1120 = vmatprep.subr.bf16.mxu0 0
        %1121 = vmatpush1.bf16.msra.mxu0 %v1087
        %1122 = vmatprep.subr.bf16.mxu0 0
        %1123 = vmatpush1.bf16.msra.mxu0 %v1088
        %1124 = vmatprep.subr.bf16.mxu0 0
        %1125 = vmatpush1.bf16.msra.mxu0 %v1089
        %1126 = vmatprep.subr.bf16.mxu0 0
        %1127 = vmatpush1.bf16.msra.mxu0 %v1090
        %1128 = vmatprep.subr.bf16.mxu0 0
        %1129 = vmatpush1.bf16.msra.mxu0 %v1091
        %1130 = vmatprep.subr.bf16.mxu0 0
        %1131 = vmatpush1.bf16.msra.mxu0 %v1092
        %1132 = vmatprep.subr.bf16.mxu0 0
        %1133 = vmatpush1.bf16.msra.mxu0 %v1093
        %1134 = vmatprep.subr.bf16.mxu0 0
        %1135 = vmatpush1.bf16.msra.mxu0 %v1094
        %1136 = vmatprep.subr.bf16.mxu0 0
        %1137 = vmatpush1.bf16.msra.mxu0 %v1095
        %1138 = vmatprep.subr.bf16.mxu0 0
        %1139 = vmatpush1.bf16.msra.mxu0 %v1096
        %1140 = vmatprep.subr.bf16.mxu0 0
        %1141 = vmatpush1.bf16.msra.mxu0 %v1097
        %1142 = vmatprep.subr.bf16.mxu0 0
        %1143 = vmatpush1.bf16.msra.mxu0 %v1098
        %1144 = vmatprep.subr.bf16.mxu0 0
        %1145 = vmatpush1.bf16.msra.mxu0 %v1099
        %1146 = vmatprep.subr.bf16.mxu0 0
        %1147 = vmatpush1.bf16.msra.mxu0 %v1100
        %1148 = vmatprep.subr.bf16.mxu0 0
        %1149 = vmatpush1.bf16.msra.mxu0 %v1101
        %1150 = vmatprep.mubr.bf16.mxu0 %v968
        %1151 = vmatmul.mubr.bf16.gmra.mrb[0].mxu0 %v967
        %v1152 = vpop.f32.mrb[0].mxu0
        %v1153 = vadd.f32 %v1020, %v1152
        %v1154 = vpop.f32.mrb[0].mxu0
        %v1155 = vpop.f32.mrb[0].mxu0
        %v1156 = vadd.f32 %v1020, %v1155
        %v1157 = vpop.f32.mrb[0].mxu0
        %1158 = vmatprep.mubr.bf16.mxu0 %v970
        %1159 = vmatmul.mubr.bf16.gmra.mrb[0].mxu0 %v969
        %v1160 = vpop.f32.mrb[0].mxu0
        %v1161 = vadd.f32 %v1020, %v1160
        %v1162 = vpop.f32.mrb[0].mxu0
        %v1163 = vpop.f32.mrb[0].mxu0
        %v1164 = vadd.f32 %v1020, %v1163
        %v1165 = vpop.f32.mrb[0].mxu0
        %1166 = vmatprep.mubr.bf16.mxu0 %v972
        %1167 = vmatmul.mubr.bf16.gmra.mrb[0].mxu0 %v971
        %v1168 = vpop.f32.mrb[0].mxu0
        %v1169 = vadd.f32 %v1020, %v1168
        %v1170 = vpop.f32.mrb[0].mxu0
        %v1171 = vpop.f32.mrb[0].mxu0
        %v1172 = vadd.f32 %v1020, %v1171
        %v1173 = vpop.f32.mrb[0].mxu0
        %1174 = vmatprep.mubr.bf16.mxu0 %v974
        %1175 = vmatmul.mubr.bf16.gmra.mrb[0].mxu0 %v973
        %v1176 = vpop.f32.mrb[0].mxu0
        %v1177 = vadd.f32 %v1020, %v1176
        %v1178 = vpop.f32.mrb[0].mxu0
        %v1179 = vpop.f32.mrb[0].mxu0
        %v1180 = vadd.f32 %v1020, %v1179
        %v1181 = vpop.f32.mrb[0].mxu0
        %1182 = vmatprep.mubr.bf16.mxu0 %v976
        %1183 = vmatmul.mubr.bf16.gmra.mrb[0].mxu0 %v975
        %v1184 = vpop.f32.mrb[0].mxu0
        %v1185 = vadd.f32 %v1020, %v1184
        %v1186 = vpop.f32.mrb[0].mxu0
        %v1187 = vpop.f32.mrb[0].mxu0
        %v1188 = vadd.f32 %v1020, %v1187
        %v1189 = vpop.f32.mrb[0].mxu0
        %1190 = vmatprep.mubr.bf16.mxu0 %v978
        %1191 = vmatmul.mubr.bf16.gmra.mrb[0].mxu0 %v977
        %v1192 = vpop.f32.mrb[0].mxu0
        %v1193 = vadd.f32 %v1020, %v1192
        %v1194 = vpop.f32.mrb[0].mxu0
        %v1195 = vpop.f32.mrb[0].mxu0
        %v1196 = vadd.f32 %v1020, %v1195
        %v1197 = vpop.f32.mrb[0].mxu0
        %1198 = vmatprep.mubr.bf16.mxu0 %v980
        %1199 = vmatmul.mubr.bf16.gmra.mrb[0].mxu0 %v979
        %v1200 = vpop.f32.mrb[0].mxu0
        %v1201 = vadd.f32 %v1020, %v1200
        %v1202 = vpop.f32.mrb[0].mxu0
        %v1203 = vpop.f32.mrb[0].mxu0
        %v1204 = vadd.f32 %v1020, %v1203
        %v1205 = vpop.f32.mrb[0].mxu0
        %1206 = vmatprep.mubr.bf16.mxu0 %v982
        %1207 = vmatmul.mubr.bf16.gmra.mrb[0].mxu0 %v981
        %v1208 = vpop.f32.mrb[0].mxu0
        %v1209 = vadd.f32 %v1020, %v1208
        %v1210 = vpop.f32.mrb[0].mxu0
        %v1211 = vpop.f32.mrb[0].mxu0
        %v1212 = vadd.f32 %v1020, %v1211
        %v1213 = vpop.f32.mrb[0].mxu0
        %1214 = vdwg.mxu0
        %v1215 = vpack.c.bf16 %v1156, %v1153
        %v1216 = vpack.c.bf16 %v1164, %v1161
        %v1217 = vpack.c.bf16 %v1172, %v1169
        %v1218 = vpack.c.bf16 %v1180, %v1177
        %v1219 = vpack.c.bf16 %v1188, %v1185
        %v1220 = vpack.c.bf16 %v1196, %v1193
        %v1221 = vpack.c.bf16 %v1204, %v1201
        %v1222 = vpack.c.bf16 %v1212, %v1209
        %v1231 = vunpack.c.l.b16 %v1215
        %v1232 = vunpack.c.h.b16 %v1215
        %v1233 = vunpack.c.l.b16 %v1216
        %v1234 = vunpack.c.h.b16 %v1216
        %v1235 = vunpack.c.l.b16 %v1217
        %v1236 = vunpack.c.h.b16 %v1217
        %v1237 = vunpack.c.l.b16 %v1218
        %v1238 = vunpack.c.h.b16 %v1218
        %v1239 = vunpack.c.l.b16 %v1219
        %v1240 = vunpack.c.h.b16 %v1219
        %v1241 = vunpack.c.l.b16 %v1220
        %v1242 = vunpack.c.h.b16 %v1220
        %v1243 = vunpack.c.l.b16 %v1221
        %v1244 = vunpack.c.h.b16 %v1221
        %v1245 = vunpack.c.l.b16 %v1222
        %v1246 = vunpack.c.h.b16 %v1222
        %v1247 = vpack.c.b16 %v1231, %v1231
        %v1248 = vpack.c.b16 %v1232, %v1232
        %v1249 = vpack.c.b16 %v1233, %v1233
        %v1250 = vpack.c.b16 %v1234, %v1234
        %v1251 = vpack.c.b16 %v1235, %v1235
        %v1252 = vpack.c.b16 %v1236, %v1236
        %v1253 = vpack.c.b16 %v1237, %v1237
        %v1254 = vpack.c.b16 %v1238, %v1238
        %v1255 = vpack.c.b16 %v1239, %v1239
        %v1256 = vpack.c.b16 %v1240, %v1240
        %v1257 = vpack.c.b16 %v1241, %v1241
        %v1258 = vpack.c.b16 %v1242, %v1242
        %v1259 = vpack.c.b16 %v1243, %v1243
        %v1260 = vpack.c.b16 %v1244, %v1244
        %v1261 = vpack.c.b16 %v1245, %v1245
        %v1262 = vpack.c.b16 %v1246, %v1246
        %1279 = vst [vmem:[%s243] sm:$0xf] %v1247
        %1280 = vst [vmem:[%s243 + $0x4] sm:$0xf] %v1248
        %1281 = vst [vmem:[%s243 + $0x8] sm:$0xf] %v1249
        %1282 = vst [vmem:[%s243 + $0xc] sm:$0xf] %v1250
        %1283 = vst [vmem:[%s243 + $0x10] sm:$0xf] %v1251
        %1284 = vst [vmem:[%s243 + $0x14] sm:$0xf] %v1252
        %1285 = vst [vmem:[%s243 + $0x18] sm:$0xf] %v1253
        %1286 = vst [vmem:[%s243 + $0x1c] sm:$0xf] %v1254
        %1287 = vst [vmem:[%s243 + $0x20] sm:$0xf] %v1255
        %1288 = vst [vmem:[%s243 + $0x24] sm:$0xf] %v1256
        %1289 = vst [vmem:[%s243 + $0x28] sm:$0xf] %v1257
        %1290 = vst [vmem:[%s243 + $0x2c] sm:$0xf] %v1258
        %1291 = vst [vmem:[%s243 + $0x30] sm:$0xf] %v1259
        %1292 = vst [vmem:[%s243 + $0x34] sm:$0xf] %v1260
        %1293 = vst [vmem:[%s243 + $0x38] sm:$0xf] %v1261
        %1294 = vst [vmem:[%s243 + $0x3c] sm:$0xf] %v1262
        %s1295 = sand.u32 %s140, 1
        %s1296 = scalar_lea.sflag [#allocation4], %s1295
        %s1297 = sand.u32 %s140, 1
        %s1298 = smul.addr %s1297, 64
        %s1299 = scalar_lea.vmem [#allocation5], %s1298
        // Predicated region
        $region45: #{tpu_custom_call.1} parent=39 // pred_check
          %p1300 = pneg %p150
        $region46: #{tpu_custom_call.1} parent=39 // pred_check_branch
          %1302 = sbr.rel (%p1300) target = $region48
        $region47: #{tpu_custom_call.1} parent=39 // pred_region
          %s1303 = smul.u32 16, %s22
          %s1305 = ssub.s32 1024, 1024
          %1306 = vsyncadd %s1296, %s1305
          %s1307 = smul.addr %s1303, 64
          %s1308 = scalar_lea.hbm %s5, %s1307
          %s1309 = sshll.u32 %s1299, 4
          %s1310 = int_to_ptr.vmem [resolvable:$true] %s1309
          %1315 = dma.vmem_to_hbm [thread:$0]  %s1310, 1024, %s1308, %s1296, 64, 64, 4
        $region48: #{tpu_custom_call.1} parent=39 // pred_fallthru
          _
      $region40: #{tpu_custom_call.1} parent=5 // pred_fallthru
        _
      %p1316 = scmp.le.s32.totalorder 2, %s17
      // Predicated region
      $region49: #{tpu_custom_call.1} parent=5 // pred_check
        %p1317 = pneg %p1316
      $region50: #{tpu_custom_call.1} parent=5 // pred_check_branch
        %1319 = sbr.rel (%p1317) target = $region52
      $region51: #{tpu_custom_call.1} parent=5 // pred_region
        %s1320 = ssub.s32 %s17, 2
        // Predicated region
        $region53: #{tpu_custom_call.1} parent=51 // pred_check
          %p1321 = pneg %p156
        $region54: #{tpu_custom_call.1} parent=51 // pred_check_branch
          %1323 = sbr.rel (%p1321) target = $region56
        $region55: #{tpu_custom_call.1} parent=51 // pred_region
          %s1324 = sand.u32 %s141, 1
          %s1325 = scalar_lea.sflag [#allocation4], %s1324
          %s1326 = sand.u32 %s141, 1
          %s1327 = smul.addr %s1326, 64
          %s1328 = scalar_lea.vmem [#allocation5], %s1327
          %1329 = dma.done %s1325, 1024
        $region56: #{tpu_custom_call.1} parent=51 // pred_fallthru
          _
      $region52: #{tpu_custom_call.1} parent=5 // pred_fallthru
        _
    $region6: #{tpu_custom_call.1} parent=1 // loop_footer
      %s21 = sadd.s32 1, %s17
    $region7: #{tpu_custom_call.1} parent=1 // loop_footer_branch
      %16 = sbr.rel target = $region3
    $region8: #{tpu_custom_call.1} parent=1 // loop_exit
      _
    %1330 = vsyncpa [#allocation3], 1
    %s1331 = scalar_lea.sflag [#allocation3], 1
    %1332 = vsyncpa %s1331, 1
    %1333 = vsyncpa [#allocation4], 1
    %s1334 = scalar_lea.sflag [#allocation4], 1
    %1335 = vsyncpa %s1334, 1

</llo_original>
